<compile_context>
chip_gen: v5e
topology: v5e:2x2
jax: 0.10.0
libtpu: 0.0.40
codegen_flags: <defaults>
</compile_context>

<pallas_src>
import jax
import jax.numpy as jnp
from jax.experimental import pallas as pl
from jax.experimental.pallas import tpu as pltpu


def _round_up(x, m):
    return ((x + m - 1) // m) * m


def _physical_vmem_bytes():
    """Per-TensorCore VMEM by chip generation (conservative if unknown)."""
    try:
        kind = jax.devices()[0].device_kind.lower()
    except Exception:
        kind = ""
    if any(tag in kind for tag in ("v4", "v5", "v6")):
        return 128 * 1024 * 1024
    return 64 * 1024 * 1024  # v7x (and unknown): be conservative


def _q_network_kernel(state_ref, w1_ref, b1_ref, w2_ref, b2_ref,
                      w3_ref, b3_ref, out_ref):
    """Fused 3-layer MLP + softmax on one (TILE_B, ...) batch tile."""
    x = state_ref[...]                                           # (TB, S) bf16

    # Layer 1: Linear + ReLU  (bf16 MXU inputs, f32 accumulate / elementwise)
    h1 = jnp.dot(x, w1_ref[...], preferred_element_type=jnp.float32) + b1_ref[...]
    h1 = jnp.maximum(h1, 0.0)

    # Layer 2: Linear + ReLU
    h2 = jnp.dot(h1.astype(jnp.bfloat16), w2_ref[...],
                 preferred_element_type=jnp.float32) + b2_ref[...]
    h2 = jnp.maximum(h2, 0.0)

    # Layer 3: Linear (padded action columns have -1e30 bias -> prob ~ 0)
    logits = jnp.dot(h2.astype(jnp.bfloat16), w3_ref[...],
                     preferred_element_type=jnp.float32) + b3_ref[...]

    # Numerically-stable softmax over the lane-dense (padded) action axis.
    m = jnp.max(logits, axis=-1, keepdims=True)
    e = jnp.exp(logits - m)
    denom = jnp.sum(e, axis=-1, keepdims=True)
    out_ref[...] = (e * pl.reciprocal(denom, approx=True)).astype(out_ref.dtype)


def pack_params(params):
    """One-time pad/cast of PyTorch-style params into kernel-ready form.

    params: dict with w1 (S,H), b1 (1,H) or (H,), w2 (H,H), b2, w3 (H,A), b3
            (weights stored (in, out), i.e. nn.Linear weight transposed).
    """
    S, H = params["w1"].shape
    A = params["w3"].shape[1]
    Hp = _round_up(H, 128)
    Ap = _round_up(A, 128)

    def b2d(b, n):
        return jnp.asarray(b, jnp.float32).reshape(1, n)

    w1 = jnp.zeros((S, Hp), jnp.float32).at[:, :H].set(params["w1"]).astype(jnp.bfloat16)
    b1 = jnp.zeros((1, Hp), jnp.float32).at[:, :H].set(b2d(params["b1"], H))
    w2 = jnp.zeros((Hp, Hp), jnp.float32).at[:H, :H].set(params["w2"]).astype(jnp.bfloat16)
    b2 = jnp.zeros((1, Hp), jnp.float32).at[:, :H].set(b2d(params["b2"], H))
    w3 = jnp.zeros((Hp, Ap), jnp.float32).at[:H, :A].set(params["w3"]).astype(jnp.bfloat16)
    # Padded action columns get a huge negative bias so softmax sends them to ~0.
    b3 = jnp.full((1, Ap), -1e30, jnp.float32).at[:, :A].set(b2d(params["b3"], A))

    return {"w1": w1, "b1": b1, "w2": w2, "b2": b2, "w3": w3, "b3": b3,
            "state_dim": S, "hidden_dim": H, "action_dim": A, "Hp": Hp, "Ap": Ap}


def q_network_forward(state, packed, *, tile_b=None, out_dtype=jnp.float32):
    """Run the fused MLP+softmax Pallas kernel.

    state:  (B, state_dim) float array
    packed: output of pack_params()
    returns (B, action_dim) float32 softmaxed action values.
    """
    B, S = state.shape
    assert S == packed["state_dim"], "state_dim mismatch with packed params"
    Hp, Ap, A = packed["Hp"], packed["Ap"], packed["action_dim"]

    vmem_phys = _physical_vmem_bytes()
    vmem_cap = (vmem_phys * 3) // 4           # ~96 MiB on v5e/v6e, ~48 MiB on v7x
    if tile_b is None:
        tile_b = 1024 if vmem_phys >= 128 * 1024 * 1024 else 512

    # Batch tile: multiple of 8, and >= 2 grid steps whenever possible so the
    # "parallel" grid axis can be split across v7x's two TensorCores.
    tb = min(tile_b, _round_up(B, 8))
    two_way = _round_up(pl.cdiv(B, 2), 8)
    if B > 8 and two_way < tb:
        tb = two_way
    tb = max(8, (tb // 8) * 8)
    Bp = _round_up(B, tb)
    grid = (Bp // tb,)

    # Stream state as bf16 (it is only ever an MXU input).
    state_bf16 = state.astype(jnp.bfloat16)
    if Bp != B:
        state_bf16 = jnp.zeros((Bp, S), jnp.bfloat16).at[:B].set(state_bf16)

    # VMEM budget: sized conservatively (as if weights were double-buffered),
    # then clamped to the per-generation cap.
    out_itemsize = jnp.dtype(out_dtype).itemsize
    weight_bytes = 2 * 2 * (S * Hp + Hp * Hp + Hp * Ap)      # bf16, 2 buffers
    bias_bytes = 2 * 4 * (2 * Hp + Ap)
    stream_bytes = 2 * (tb * S * 2 + tb * Ap * out_itemsize)
    scratch_bytes = 4 * tb * Hp * 4
    vmem_limit = int(min(max(2 * (weight_bytes + bias_bytes + stream_bytes
                                  + scratch_bytes),
                             16 * 1024 * 1024),
                         vmem_cap))

    const2 = lambda i: (0, 0)   # weights/biases: same block every grid step

    def call(single_buffer_weights):
        def wspec(shape):
            if single_buffer_weights:
                return pl.BlockSpec(shape, const2, pipeline_mode=pl.Buffered(1))
            return pl.BlockSpec(shape, const2)

        return pl.pallas_call(
            _q_network_kernel,
            out_shape=jax.ShapeDtypeStruct((Bp, Ap), out_dtype),
            grid=grid,
            in_specs=[
                pl.BlockSpec((tb, S), lambda i: (i, 0)),   # state: streamed
                wspec((S, Hp)),                            # w1 (VMEM-resident)
                wspec((1, Hp)),                            # b1
                wspec((Hp, Hp)),                           # w2
                wspec((1, Hp)),                            # b2
                wspec((Hp, Ap)),                           # w3
                wspec((1, Ap)),                            # b3
            ],
            out_specs=pl.BlockSpec((tb, Ap), lambda i: (i, 0)),
            compiler_params=pltpu.CompilerParams(
                dimension_semantics=("parallel",),
                vmem_limit_bytes=vmem_limit,
            ),
        )(state_bf16, packed["w1"], packed["b1"], packed["w2"], packed["b2"],
          packed["w3"], packed["b3"])

    try:
        out = call(True)                       # single-buffered resident weights
    except Exception:
        out = call(False)                      # fallback: default pipelining

    return out[:B, :A]


def init_params(key, state_dim, action_dim, hidden_dim):
    """Deterministic init mirroring nn.Linear shapes (weights transposed)."""
    ks = jax.random.split(key, 6)

    def linear(kw, kb, fan_in, fan_out):
        bound = 1.0 / jnp.sqrt(fan_in)
        w = jax.random.uniform(kw, (fan_in, fan_out), jnp.float32, -bound, bound)
        b = jax.random.uniform(kb, (1, fan_out), jnp.float32, -bound, bound)
        return w, b

    w1, b1 = linear(ks[0], ks[1], state_dim, hidden_dim)
    w2, b2 = linear(ks[2], ks[3], hidden_dim, hidden_dim)
    w3, b3 = linear(ks[4], ks[5], hidden_dim, action_dim)
    return {"w1": w1, "b1": b1, "w2": w2, "b2": b2, "w3": w3, "b3": b3}


if __name__ == "__main__":
    key = jax.random.PRNGKey(0)
    k_state, k_params = jax.random.split(key)

    batch = 8
    state_dim = 16
    hidden_dim = 32
    action_dim = 4

    state = jax.random.normal(k_state, (batch, state_dim), jnp.float32)
    params = init_params(k_params, state_dim, action_dim, hidden_dim)

    packed = pack_params(params)               # one-time pad + bf16 cast
    out = q_network_forward(state, packed)
    out = jax.block_until_ready(out)

    # Reference mirroring the kernel numerics (bf16 MXU inputs, f32 accumulate).
    def mm(a, w):
        return jnp.dot(a.astype(jnp.bfloat16), w.astype(jnp.bfloat16),
                       preferred_element_type=jnp.float32)

    h1 = jnp.maximum(mm(state, params["w1"]) + params["b1"], 0.0)
    h2 = jnp.maximum(mm(h1, params["w2"]) + params["b2"], 0.0)
    logits = mm(h2, params["w3"]) + params["b3"]
    ref = jax.nn.softmax(logits, axis=-1)

    # Pure-f32 reference (original PyTorch semantics) — looser check (bf16 weights).
    h1f = jnp.maximum(state @ params["w1"] + params["b1"], 0.0)
    h2f = jnp.maximum(h1f @ params["w2"] + params["b2"], 0.0)
    ref_f32 = jax.nn.softmax(h2f @ params["w3"] + params["b3"], axis=-1)

    assert out.shape == (batch, action_dim)
    # approx reciprocal on the EUP -> slightly looser tolerance vs bf16-matched ref.
    assert jnp.allclose(out, ref, atol=2e-3), "mismatch vs bf16-matched reference"
    assert jnp.allclose(out, ref_f32, atol=2e-2), "mismatch vs f32 reference"
    assert jnp.allclose(jnp.sum(out, axis=-1), 1.0, atol=5e-3)

    print("KERNEL_OK")
</pallas_src>

<mosaic_0001>
module attributes {stable_mosaic.version = 11 : i64} {
  func.func @_q_network_kernel(%arg0: i32, %arg1: memref<8x16xbf16, #tpu.memory_space<vmem>>, %arg2: memref<16x128xbf16, #tpu.memory_space<vmem>>, %arg3: memref<1x128xf32, #tpu.memory_space<vmem>>, %arg4: memref<128x128xbf16, #tpu.memory_space<vmem>>, %arg5: memref<1x128xf32, #tpu.memory_space<vmem>>, %arg6: memref<128x128xbf16, #tpu.memory_space<vmem>>, %arg7: memref<1x128xf32, #tpu.memory_space<vmem>>, %arg8: memref<8x128xf32, #tpu.memory_space<vmem>>) attributes {dimension_semantics = [#tpu.dimension_semantics<parallel>], iteration_bounds = array<i64: 1>, scalar_prefetch = 0 : i64, scratch_operands = 0 : i64, tpu.core_type = #tpu.core_type<tc>, window_params = [{transform_indices = @transform_0, window_bounds = array<i64: 8, 16>}, {pipeline_mode = #tpu.pipeline_mode<synchronous>, transform_indices = @transform_1, window_bounds = array<i64: 16, 128>}, {pipeline_mode = #tpu.pipeline_mode<synchronous>, transform_indices = @transform_2, window_bounds = array<i64: 1, 128>}, {pipeline_mode = #tpu.pipeline_mode<synchronous>, transform_indices = @transform_3, window_bounds = array<i64: 128, 128>}, {pipeline_mode = #tpu.pipeline_mode<synchronous>, transform_indices = @transform_4, window_bounds = array<i64: 1, 128>}, {pipeline_mode = #tpu.pipeline_mode<synchronous>, transform_indices = @transform_5, window_bounds = array<i64: 128, 128>}, {pipeline_mode = #tpu.pipeline_mode<synchronous>, transform_indices = @transform_6, window_bounds = array<i64: 1, 128>}, {transform_indices = @transform_7, window_bounds = array<i64: 8, 128>}]} {
    %c0 = arith.constant 0 : index
    %c0_0 = arith.constant 0 : index
    %0 = vector.load %arg1[%c0, %c0_0] : memref<8x16xbf16, #tpu.memory_space<vmem>>, vector<8x16xbf16>
    %c0_1 = arith.constant 0 : index
    %c0_2 = arith.constant 0 : index
    %1 = vector.load %arg2[%c0_1, %c0_2] : memref<16x128xbf16, #tpu.memory_space<vmem>>, vector<16x128xbf16>
    %cst = arith.constant dense<0.000000e+00> : vector<8x128xf32>
    %2 = tpu.matmul %0, %1, %cst {dimension_numbers = #tpu.dot_dimension_numbers<[1], [0], [0], [1], [0, 0, 1, 1], [], []>} : vector<8x16xbf16>, vector<16x128xbf16>, vector<8x128xf32> -> vector<8x128xf32>
    %c0_3 = arith.constant 0 : index
    %c0_4 = arith.constant 0 : index
    %3 = vector.load %arg3[%c0_3, %c0_4] : memref<1x128xf32, #tpu.memory_space<vmem>>, vector<1x128xf32>
    %4 = vector.broadcast %3 : vector<1x128xf32> to vector<8x128xf32>
    %5 = arith.addf %2, %4 : vector<8x128xf32>
    %cst_5 = arith.constant 0.000000e+00 : f32
    %6 = vector.broadcast %cst_5 : f32 to vector<8x128xf32>
    %7 = arith.maximumf %5, %6 : vector<8x128xf32>
    %8 = arith.truncf %7 : vector<8x128xf32> to vector<8x128xbf16>
    %c0_6 = arith.constant 0 : index
    %c0_7 = arith.constant 0 : index
    %9 = vector.load %arg4[%c0_6, %c0_7] : memref<128x128xbf16, #tpu.memory_space<vmem>>, vector<128x128xbf16>
    %cst_8 = arith.constant dense<0.000000e+00> : vector<8x128xf32>
    %10 = tpu.matmul %8, %9, %cst_8 {dimension_numbers = #tpu.dot_dimension_numbers<[1], [0], [0], [1], [0, 0, 1, 1], [], []>} : vector<8x128xbf16>, vector<128x128xbf16>, vector<8x128xf32> -> vector<8x128xf32>
    %c0_9 = arith.constant 0 : index
    %c0_10 = arith.constant 0 : index
    %11 = vector.load %arg5[%c0_9, %c0_10] : memref<1x128xf32, #tpu.memory_space<vmem>>, vector<1x128xf32>
    %12 = vector.broadcast %11 : vector<1x128xf32> to vector<8x128xf32>
    %13 = arith.addf %10, %12 : vector<8x128xf32>
    %cst_11 = arith.constant 0.000000e+00 : f32
    %14 = vector.broadcast %cst_11 : f32 to vector<8x128xf32>
    %15 = arith.maximumf %13, %14 : vector<8x128xf32>
    %16 = arith.truncf %15 : vector<8x128xf32> to vector<8x128xbf16>
    %c0_12 = arith.constant 0 : index
    %c0_13 = arith.constant 0 : index
    %17 = vector.load %arg6[%c0_12, %c0_13] : memref<128x128xbf16, #tpu.memory_space<vmem>>, vector<128x128xbf16>
    %cst_14 = arith.constant dense<0.000000e+00> : vector<8x128xf32>
    %18 = tpu.matmul %16, %17, %cst_14 {dimension_numbers = #tpu.dot_dimension_numbers<[1], [0], [0], [1], [0, 0, 1, 1], [], []>} : vector<8x128xbf16>, vector<128x128xbf16>, vector<8x128xf32> -> vector<8x128xf32>
    %c0_15 = arith.constant 0 : index
    %c0_16 = arith.constant 0 : index
    %19 = vector.load %arg7[%c0_15, %c0_16] : memref<1x128xf32, #tpu.memory_space<vmem>>, vector<1x128xf32>
    %20 = vector.broadcast %19 : vector<1x128xf32> to vector<8x128xf32>
    %21 = arith.addf %18, %20 : vector<8x128xf32>
    %cst_17 = arith.constant dense<0xFF800000> : vector<8xf32>
    %22 = vector.multi_reduction <maximumf>, %21, %cst_17 [1] : vector<8x128xf32> to vector<8xf32>
    %23 = vector.shape_cast %22 : vector<8xf32> to vector<8x1xf32>
    %24 = vector.broadcast %23 : vector<8x1xf32> to vector<8x128xf32>
    %25 = arith.subf %21, %24 : vector<8x128xf32>
    %26 = math.exp %25 : vector<8x128xf32>
    %cst_18 = arith.constant dense<0.000000e+00> : vector<8xf32>
    %27 = vector.multi_reduction <add>, %26, %cst_18 [1] : vector<8x128xf32> to vector<8xf32>
    %28 = vector.shape_cast %27 : vector<8xf32> to vector<8x1xf32>
    %29 = tpu.reciprocal %28 {approx = true} : vector<8x1xf32> -> vector<8x1xf32>
    %30 = vector.broadcast %29 : vector<8x1xf32> to vector<8x128xf32>
    %31 = arith.mulf %26, %30 : vector<8x128xf32>
    %c0_19 = arith.constant 0 : index
    %c0_20 = arith.constant 0 : index
    %32 = vector.load %arg8[%c0_19, %c0_20] : memref<8x128xf32, #tpu.memory_space<vmem>>, vector<8x128xf32>
    tpu.vector_store %arg8[%c0_19, %c0_20], %31 {strides = array<i32>} : memref<8x128xf32, #tpu.memory_space<vmem>>, vector<8x128xf32>,
    return
  }
  func.func @transform_0(%arg0: i32) -> (i32, i32) {
    %c0_i32 = arith.constant 0 : i32
    %c0_i32_0 = arith.constant 0 : i32
    return %arg0, %c0_i32 : i32, i32
  }
  func.func @transform_1(%arg0: i32) -> (i32, i32) {
    %c0_i32 = arith.constant 0 : i32
    %c0_i32_0 = arith.constant 0 : i32
    %c0_i32_1 = arith.constant 0 : i32
    return %c0_i32, %c0_i32_0 : i32, i32
  }
  func.func @transform_2(%arg0: i32) -> (i32, i32) {
    %c0_i32 = arith.constant 0 : i32
    %c0_i32_0 = arith.constant 0 : i32
    %c0_i32_1 = arith.constant 0 : i32
    return %c0_i32, %c0_i32_0 : i32, i32
  }
  func.func @transform_3(%arg0: i32) -> (i32, i32) {
    %c0_i32 = arith.constant 0 : i32
    %c0_i32_0 = arith.constant 0 : i32
    %c0_i32_1 = arith.constant 0 : i32
    return %c0_i32, %c0_i32_0 : i32, i32
  }
  func.func @transform_4(%arg0: i32) -> (i32, i32) {
    %c0_i32 = arith.constant 0 : i32
    %c0_i32_0 = arith.constant 0 : i32
    %c0_i32_1 = arith.constant 0 : i32
    return %c0_i32, %c0_i32_0 : i32, i32
  }
  func.func @transform_5(%arg0: i32) -> (i32, i32) {
    %c0_i32 = arith.constant 0 : i32
    %c0_i32_0 = arith.constant 0 : i32
    %c0_i32_1 = arith.constant 0 : i32
    return %c0_i32, %c0_i32_0 : i32, i32
  }
  func.func @transform_6(%arg0: i32) -> (i32, i32) {
    %c0_i32 = arith.constant 0 : i32
    %c0_i32_0 = arith.constant 0 : i32
    %c0_i32_1 = arith.constant 0 : i32
    return %c0_i32, %c0_i32_0 : i32, i32
  }
  func.func @transform_7(%arg0: i32) -> (i32, i32) {
    %c0_i32 = arith.constant 0 : i32
    %c0_i32_0 = arith.constant 0 : i32
    return %arg0, %c0_i32 : i32, i32
  }
}

module attributes {stable_mosaic.version = 11 : i64} {
  func.func @_q_network_kernel(%arg0: i32, %arg1: memref<8x16xbf16, #tpu.memory_space<vmem>>, %arg2: memref<16x128xbf16, #tpu.memory_space<vmem>>, %arg3: memref<1x128xf32, #tpu.memory_space<vmem>>, %arg4: memref<128x128xbf16, #tpu.memory_space<vmem>>, %arg5: memref<1x128xf32, #tpu.memory_space<vmem>>, %arg6: memref<128x128xbf16, #tpu.memory_space<vmem>>, %arg7: memref<1x128xf32, #tpu.memory_space<vmem>>, %arg8: memref<8x128xf32, #tpu.memory_space<vmem>>) attributes {dimension_semantics = [#tpu.dimension_semantics<parallel>], iteration_bounds = array<i64: 1>, scalar_prefetch = 0 : i64, scratch_operands = 0 : i64, tpu.core_type = #tpu.core_type<tc>, window_params = [{transform_indices = @transform_0, window_bounds = array<i64: 8, 16>}, {pipeline_mode = #tpu.pipeline_mode<synchronous>, transform_indices = @transform_1, window_bounds = array<i64: 16, 128>}, {pipeline_mode = #tpu.pipeline_mode<synchronous>, transform_indices = @transform_2, window_bounds = array<i64: 1, 128>}, {pipeline_mode = #tpu.pipeline_mode<synchronous>, transform_indices = @transform_3, window_bounds = array<i64: 128, 128>}, {pipeline_mode = #tpu.pipeline_mode<synchronous>, transform_indices = @transform_4, window_bounds = array<i64: 1, 128>}, {pipeline_mode = #tpu.pipeline_mode<synchronous>, transform_indices = @transform_5, window_bounds = array<i64: 128, 128>}, {pipeline_mode = #tpu.pipeline_mode<synchronous>, transform_indices = @transform_6, window_bounds = array<i64: 1, 128>}, {transform_indices = @transform_7, window_bounds = array<i64: 8, 128>}]} {
    %c0 = arith.constant 0 : index
    %c0_0 = arith.constant 0 : index
    %0 = vector.load %arg1[%c0, %c0_0] : memref<8x16xbf16, #tpu.memory_space<vmem>>, vector<8x16xbf16>
    %c0_1 = arith.constant 0 : index
    %c0_2 = arith.constant 0 : index
    %1 = vector.load %arg2[%c0_1, %c0_2] : memref<16x128xbf16, #tpu.memory_space<vmem>>, vector<16x128xbf16>
    %cst = arith.constant dense<0.000000e+00> : vector<8x128xf32>
    %2 = tpu.matmul %0, %1, %cst {dimension_numbers = #tpu.dot_dimension_numbers<[1], [0], [0], [1], [0, 0, 1, 1], [], []>} : vector<8x16xbf16>, vector<16x128xbf16>, vector<8x128xf32> -> vector<8x128xf32>
    %c0_3 = arith.constant 0 : index
    %c0_4 = arith.constant 0 : index
    %3 = vector.load %arg3[%c0_3, %c0_4] : memref<1x128xf32, #tpu.memory_space<vmem>>, vector<1x128xf32>
    %4 = vector.broadcast %3 : vector<1x128xf32> to vector<8x128xf32>
    %5 = arith.addf %2, %4 : vector<8x128xf32>
    %cst_5 = arith.constant 0.000000e+00 : f32
    %6 = vector.broadcast %cst_5 : f32 to vector<8x128xf32>
    %7 = arith.maximumf %5, %6 : vector<8x128xf32>
    %8 = arith.truncf %7 : vector<8x128xf32> to vector<8x128xbf16>
    %c0_6 = arith.constant 0 : index
    %c0_7 = arith.constant 0 : index
    %9 = vector.load %arg4[%c0_6, %c0_7] : memref<128x128xbf16, #tpu.memory_space<vmem>>, vector<128x128xbf16>
    %cst_8 = arith.constant dense<0.000000e+00> : vector<8x128xf32>
    %10 = tpu.matmul %8, %9, %cst_8 {dimension_numbers = #tpu.dot_dimension_numbers<[1], [0], [0], [1], [0, 0, 1, 1], [], []>} : vector<8x128xbf16>, vector<128x128xbf16>, vector<8x128xf32> -> vector<8x128xf32>
    %c0_9 = arith.constant 0 : index
    %c0_10 = arith.constant 0 : index
    %11 = vector.load %arg5[%c0_9, %c0_10] : memref<1x128xf32, #tpu.memory_space<vmem>>, vector<1x128xf32>
    %12 = vector.broadcast %11 : vector<1x128xf32> to vector<8x128xf32>
    %13 = arith.addf %10, %12 : vector<8x128xf32>
    %cst_11 = arith.constant 0.000000e+00 : f32
    %14 = vector.broadcast %cst_11 : f32 to vector<8x128xf32>
    %15 = arith.maximumf %13, %14 : vector<8x128xf32>
    %16 = arith.truncf %15 : vector<8x128xf32> to vector<8x128xbf16>
    %c0_12 = arith.constant 0 : index
    %c0_13 = arith.constant 0 : index
    %17 = vector.load %arg6[%c0_12, %c0_13] : memref<128x128xbf16, #tpu.memory_space<vmem>>, vector<128x128xbf16>
    %cst_14 = arith.constant dense<0.000000e+00> : vector<8x128xf32>
    %18 = tpu.matmul %16, %17, %cst_14 {dimension_numbers = #tpu.dot_dimension_numbers<[1], [0], [0], [1], [0, 0, 1, 1], [], []>} : vector<8x128xbf16>, vector<128x128xbf16>, vector<8x128xf32> -> vector<8x128xf32>
    %c0_15 = arith.constant 0 : index
    %c0_16 = arith.constant 0 : index
    %19 = vector.load %arg7[%c0_15, %c0_16] : memref<1x128xf32, #tpu.memory_space<vmem>>, vector<1x128xf32>
    %20 = vector.broadcast %19 : vector<1x128xf32> to vector<8x128xf32>
    %21 = arith.addf %18, %20 : vector<8x128xf32>
    %cst_17 = arith.constant dense<0xFF800000> : vector<8xf32>
    %22 = vector.multi_reduction <maximumf>, %21, %cst_17 [1] : vector<8x128xf32> to vector<8xf32>
    %23 = vector.shape_cast %22 : vector<8xf32> to vector<8x1xf32>
    %24 = vector.broadcast %23 : vector<8x1xf32> to vector<8x128xf32>
    %25 = arith.subf %21, %24 : vector<8x128xf32>
    %26 = math.exp %25 : vector<8x128xf32>
    %cst_18 = arith.constant dense<0.000000e+00> : vector<8xf32>
    %27 = vector.multi_reduction <add>, %26, %cst_18 [1] : vector<8x128xf32> to vector<8xf32>
    %28 = vector.shape_cast %27 : vector<8xf32> to vector<8x1xf32>
    %29 = tpu.reciprocal %28 {approx = true} : vector<8x1xf32> -> vector<8x1xf32>
    %30 = vector.broadcast %29 : vector<8x1xf32> to vector<8x128xf32>
    %31 = arith.mulf %26, %30 : vector<8x128xf32>
    %c0_19 = arith.constant 0 : index
    %c0_20 = arith.constant 0 : index
    %32 = vector.load %arg8[%c0_19, %c0_20] : memref<8x128xf32, #tpu.memory_space<vmem>>, vector<8x128xf32>
    tpu.vector_store %arg8[%c0_19, %c0_20], %31 {strides = array<i32>} : memref<8x128xf32, #tpu.memory_space<vmem>>, vector<8x128xf32>,
    return
  }
  func.func @transform_0(%arg0: i32) -> (i32, i32) {
    %c0_i32 = arith.constant 0 : i32
    %c0_i32_0 = arith.constant 0 : i32
    return %arg0, %c0_i32 : i32, i32
  }
  func.func @transform_1(%arg0: i32) -> (i32, i32) {
    %c0_i32 = arith.constant 0 : i32
    %c0_i32_0 = arith.constant 0 : i32
    %c0_i32_1 = arith.constant 0 : i32
    return %c0_i32, %c0_i32_0 : i32, i32
  }
  func.func @transform_2(%arg0: i32) -> (i32, i32) {
    %c0_i32 = arith.constant 0 : i32
    %c0_i32_0 = arith.constant 0 : i32
    %c0_i32_1 = arith.constant 0 : i32
    return %c0_i32, %c0_i32_0 : i32, i32
  }
  func.func @transform_3(%arg0: i32) -> (i32, i32) {
    %c0_i32 = arith.constant 0 : i32
    %c0_i32_0 = arith.constant 0 : i32
    %c0_i32_1 = arith.constant 0 : i32
    return %c0_i32, %c0_i32_0 : i32, i32
  }
  func.func @transform_4(%arg0: i32) -> (i32, i32) {
    %c0_i32 = arith.constant 0 : i32
    %c0_i32_0 = arith.constant 0 : i32
    %c0_i32_1 = arith.constant 0 : i32
    return %c0_i32, %c0_i32_0 : i32, i32
  }
  func.func @transform_5(%arg0: i32) -> (i32, i32) {
    %c0_i32 = arith.constant 0 : i32
    %c0_i32_0 = arith.constant 0 : i32
    %c0_i32_1 = arith.constant 0 : i32
    return %c0_i32, %c0_i32_0 : i32, i32
  }
  func.func @transform_6(%arg0: i32) -> (i32, i32) {
    %c0_i32 = arith.constant 0 : i32
    %c0_i32_0 = arith.constant 0 : i32
    %c0_i32_1 = arith.constant 0 : i32
    return %c0_i32, %c0_i32_0 : i32, i32
  }
  func.func @transform_7(%arg0: i32) -> (i32, i32) {
    %c0_i32 = arith.constant 0 : i32
    %c0_i32_0 = arith.constant 0 : i32
    return %arg0, %c0_i32 : i32, i32
  }
}

</mosaic_0001>

<llo_original>
// kernel: tpu_custom_call.1
$region0: #{tpu_custom_call.1}
  #allocation0 [shape = 'u32[]', space=smem, size = 0x4, offset = 0x4, fixed_abs, tag = 'smem constant byte address 0x4 - core index']
  #allocation1 [shape = 'u32[72,128]{1,0:T(1,128)}', space=vmem, size = 0x9000, scoped, tag = 'internal scratch']
  %s0 = inlined_call_operand.hbm [shape: bf16[8,16], index: 0, kind: input, shape index: {}]
  %s1 = inlined_call_operand.hbm [shape: bf16[16,128], index: 1, kind: input, shape index: {}]
  %s2 = inlined_call_operand.vmem [shape: f32[1,128], index: 2, kind: input, shape index: {}]
  %s3 = inlined_call_operand.hbm [shape: bf16[128,128], index: 3, kind: input, shape index: {}]
  %s4 = inlined_call_operand.vmem [shape: f32[1,128], index: 4, kind: input, shape index: {}]
  %s5 = inlined_call_operand.hbm [shape: bf16[128,128], index: 5, kind: input, shape index: {}]
  %s6 = inlined_call_operand.vmem [shape: f32[1,128], index: 6, kind: input, shape index: {}]
  %s7 = inlined_call_operand.hbm [shape: f32[8,128], index: 7, kind: output, shape index: {}]
  %s8 = sld [smem:[#allocation0]]
  $region54: #{tpu_custom_call.1} parent=0
    _
  %s10 = ssub.s32 1, %s8
  %s11 = scalar_select 0, %s10, %s8
  $region1: #{tpu_custom_call.1} parent=0
    #allocation2 [shape = 'u8[2048]{0}', space=vmem, size = 0x800, scoped, tag = 'input window, operand 0, single buffered']
    #allocation3 [shape = 's32[1]{0}', space=sflag, size = 0x4, scoped, tag = 'scoped memory for tpu_custom_call.1']
    #allocation4 [shape = 's32[1]{0}', space=sflag, size = 0x4, scoped, tag = 'scoped memory for tpu_custom_call.1']
    #allocation5 [shape = 'u8[4096]{0}', space=vmem, size = 0x1000, scoped, tag = 'input window, operand 1, single buffered']
    #allocation6 [shape = 's32[1]{0}', space=sflag, size = 0x4, scoped, tag = 'scoped memory for tpu_custom_call.1']
    #allocation7 [shape = 'u8[32768]{0}', space=vmem, size = 0x8000, scoped, tag = 'input window, operand 3, single buffered']
    #allocation8 [shape = 'u8[32768]{0}', space=vmem, size = 0x8000, scoped, tag = 'input window, operand 5, single buffered']
    #allocation9 [shape = 's32[1]{0}', space=sflag, size = 0x4, scoped, tag = 'scoped memory for tpu_custom_call.1']
    #allocation10 [shape = 'u8[4096]{0}', space=vmem, size = 0x1000, scoped, tag = 'output window, operand 0, single buffered']
    %12 = vsyncpa [#allocation3], 0
    %13 = vsyncpa [#allocation6], 0
    %14 = vsyncpa [#allocation9], 0
    %15 = vsyncpa [#allocation4], 0
    // Predicated region
    $region2: #{tpu_custom_call.1} parent=1 // pred_check
      _
    $region3: #{tpu_custom_call.1} parent=1 // pred_check_branch
      %17 = sbr.rel (0) target = $region5
    $region4: #{tpu_custom_call.1} parent=1 // pred_region
      %19 = vsyncadd [#allocation3], 0
      %s21 = sshll.u32 %s0, 4
      %s22 = int_to_ptr.hbm [resolvable:$true] %s21
      %s23 = sshll.u32 [#allocation2], 4
      %s24 = int_to_ptr.vmem [resolvable:$true] %s23
      %26 = dma.hbm_to_vmem [thread:$0]  %s22, 64, %s24, [#allocation3]
    $region5: #{tpu_custom_call.1} parent=1 // pred_fallthru
      _
    // Predicated region
    $region6: #{tpu_custom_call.1} parent=1 // pred_check
      _
    $region7: #{tpu_custom_call.1} parent=1 // pred_check_branch
      %28 = sbr.rel (0) target = $region9
    $region8: #{tpu_custom_call.1} parent=1 // pred_region
      %30 = vsyncadd [#allocation6], 0
      %s31 = sshll.u32 %s1, 4
      %s32 = int_to_ptr.hbm [resolvable:$true] %s31
      %s33 = sshll.u32 [#allocation5], 4
      %s34 = int_to_ptr.vmem [resolvable:$true] %s33
      %39 = dma.hbm_to_vmem [thread:$0]  %s32, 128, %s34, [#allocation6], 64, 64, 4
    $region9: #{tpu_custom_call.1} parent=1 // pred_fallthru
      _
    // Predicated region
    $region10: #{tpu_custom_call.1} parent=1 // pred_check
      _
    $region11: #{tpu_custom_call.1} parent=1 // pred_check_branch
      %41 = sbr.rel (0) target = $region13
    $region12: #{tpu_custom_call.1} parent=1 // pred_region
      _
    $region13: #{tpu_custom_call.1} parent=1 // pred_fallthru
      _
    // Predicated region
    $region14: #{tpu_custom_call.1} parent=1 // pred_check
      _
    $region15: #{tpu_custom_call.1} parent=1 // pred_check_branch
      %43 = sbr.rel (0) target = $region17
    $region16: #{tpu_custom_call.1} parent=1 // pred_region
      %45 = vsyncadd [#allocation6], 0
      %s46 = sshll.u32 %s3, 4
      %s47 = int_to_ptr.hbm [resolvable:$true] %s46
      %s48 = sshll.u32 [#allocation7], 4
      %s49 = int_to_ptr.vmem [resolvable:$true] %s48
      %54 = dma.hbm_to_vmem [thread:$0]  %s47, 1024, %s49, [#allocation6], 64, 64, 4
    $region17: #{tpu_custom_call.1} parent=1 // pred_fallthru
      _
    // Predicated region
    $region18: #{tpu_custom_call.1} parent=1 // pred_check
      _
    $region19: #{tpu_custom_call.1} parent=1 // pred_check_branch
      %56 = sbr.rel (0) target = $region21
    $region20: #{tpu_custom_call.1} parent=1 // pred_region
      _
    $region21: #{tpu_custom_call.1} parent=1 // pred_fallthru
      _
    // Predicated region
    $region22: #{tpu_custom_call.1} parent=1 // pred_check
      _
    $region23: #{tpu_custom_call.1} parent=1 // pred_check_branch
      %58 = sbr.rel (0) target = $region25
    $region24: #{tpu_custom_call.1} parent=1 // pred_region
      %60 = vsyncadd [#allocation9], 0
      %s61 = sshll.u32 %s5, 4
      %s62 = int_to_ptr.hbm [resolvable:$true] %s61
      %s63 = sshll.u32 [#allocation8], 4
      %s64 = int_to_ptr.vmem [resolvable:$true] %s63
      %69 = dma.hbm_to_vmem [thread:$0]  %s62, 1024, %s64, [#allocation9], 64, 64, 4
    $region25: #{tpu_custom_call.1} parent=1 // pred_fallthru
      _
    // Predicated region
    $region26: #{tpu_custom_call.1} parent=1 // pred_check
      _
    $region27: #{tpu_custom_call.1} parent=1 // pred_check_branch
      %71 = sbr.rel (0) target = $region29
    $region28: #{tpu_custom_call.1} parent=1 // pred_region
      _
    $region29: #{tpu_custom_call.1} parent=1 // pred_fallthru
      _
    // Predicated region
    $region30: #{tpu_custom_call.1} parent=1 // pred_check
      _
    $region31: #{tpu_custom_call.1} parent=1 // pred_check_branch
      %73 = sbr.rel (0) target = $region33
    $region32: #{tpu_custom_call.1} parent=1 // pred_region
      %75 = dma.done [#allocation3], 64
    $region33: #{tpu_custom_call.1} parent=1 // pred_fallthru
      _
    // Predicated region
    $region34: #{tpu_custom_call.1} parent=1 // pred_check
      _
    $region35: #{tpu_custom_call.1} parent=1 // pred_check_branch
      %77 = sbr.rel (0) target = $region37
    $region36: #{tpu_custom_call.1} parent=1 // pred_region
      %79 = dma.done [#allocation6], 128
    $region37: #{tpu_custom_call.1} parent=1 // pred_fallthru
      _
    // Predicated region
    $region38: #{tpu_custom_call.1} parent=1 // pred_check
      _
    $region39: #{tpu_custom_call.1} parent=1 // pred_check_branch
      %81 = sbr.rel (0) target = $region41
    $region40: #{tpu_custom_call.1} parent=1 // pred_region
      %83 = dma.done [#allocation6], 1024
    $region41: #{tpu_custom_call.1} parent=1 // pred_fallthru
      _
    // Predicated region
    $region42: #{tpu_custom_call.1} parent=1 // pred_check
      _
    $region43: #{tpu_custom_call.1} parent=1 // pred_check_branch
      %85 = sbr.rel (0) target = $region45
    $region44: #{tpu_custom_call.1} parent=1 // pred_region
      %87 = dma.done [#allocation9], 1024
    $region45: #{tpu_custom_call.1} parent=1 // pred_fallthru
      _
    %v89 = vld [vmem:[#allocation2] sm:$0xf]
    %v90 = vld [vmem:[#allocation5] sm:$0xf]
    %v91 = vld [vmem:[#allocation5 + $0x4] sm:$0xf]
    %v92 = vld [vmem:[%s2] sm:$0x1]
    %v94 = vperm.slane %v92, 0
    %v98 = vunpack.c.l.b16 %v90
    %v99 = vunpack.c.l.b16 %v91
    %v100 = vpack.c.b16 %v99, %v98
    %vm102 = vcmask 130048
    %v104 = vsel %vm102, %v89, 0
    %106 = vmatpush.bf16.msra.mxu0 0
    %107 = vmatpush.bf16.msra.mxu0 0
    %108 = vmatpush.bf16.msra.mxu0 0
    %109 = vmatpush.bf16.msra.mxu0 0
    %110 = vmatpush.bf16.msra.mxu0 0
    %111 = vmatpush.bf16.msra.mxu0 0
    %112 = vmatpush.bf16.msra.mxu0 0
    %113 = vmatpush.bf16.msra.mxu0 %v100
    %114 = vmatmul.bf16.gmra.mxu0 %v104
    %v115 = vpop.f32.mrf.mxu0
    %v116 = vadd.f32 %v94, %v115
    %v117 = vpop.f32.mrf.mxu0
    %118 = vdwg.mxu0
    %v119 = vmax.f32 %v116, 0.0
    %v120 = vpack.c.bf16 %v119, %v119
    %v121 = vld [vmem:[#allocation7] sm:$0xf]
    %v122 = vld [vmem:[#allocation7 + $0x4] sm:$0xf]
    %v123 = vld [vmem:[#allocation7 + $0x8] sm:$0xf]
    %v124 = vld [vmem:[#allocation7 + $0xc] sm:$0xf]
    %v125 = vld [vmem:[#allocation7 + $0x10] sm:$0xf]
    %v126 = vld [vmem:[#allocation7 + $0x14] sm:$0xf]
    %v127 = vld [vmem:[#allocation7 + $0x18] sm:$0xf]
    %v128 = vld [vmem:[#allocation7 + $0x1c] sm:$0xf]
    %v129 = vld [vmem:[#allocation7 + $0x20] sm:$0xf]
    %v130 = vld [vmem:[#allocation7 + $0x24] sm:$0xf]
    %v131 = vld [vmem:[#allocation7 + $0x28] sm:$0xf]
    %v132 = vld [vmem:[#allocation7 + $0x2c] sm:$0xf]
    %v133 = vld [vmem:[#allocation7 + $0x30] sm:$0xf]
    %v134 = vld [vmem:[#allocation7 + $0x34] sm:$0xf]
    %v135 = vld [vmem:[#allocation7 + $0x38] sm:$0xf]
    %v136 = vld [vmem:[#allocation7 + $0x3c] sm:$0xf]
    %v137 = vld [vmem:[%s4] sm:$0x1]
    %v139 = vperm.slane %v137, 0
    %v157 = vunpack.c.l.b16 %v121
    %v158 = vunpack.c.l.b16 %v122
    %v159 = vunpack.c.l.b16 %v123
    %v160 = vunpack.c.l.b16 %v124
    %v161 = vunpack.c.l.b16 %v125
    %v162 = vunpack.c.l.b16 %v126
    %v163 = vunpack.c.l.b16 %v127
    %v164 = vunpack.c.l.b16 %v128
    %v165 = vunpack.c.l.b16 %v129
    %v166 = vunpack.c.l.b16 %v130
    %v167 = vunpack.c.l.b16 %v131
    %v168 = vunpack.c.l.b16 %v132
    %v169 = vunpack.c.l.b16 %v133
    %v170 = vunpack.c.l.b16 %v134
    %v171 = vunpack.c.l.b16 %v135
    %v172 = vunpack.c.l.b16 %v136
    %v173 = vpack.c.b16 %v158, %v157
    %v174 = vpack.c.b16 %v160, %v159
    %v175 = vpack.c.b16 %v162, %v161
    %v176 = vpack.c.b16 %v164, %v163
    %v177 = vpack.c.b16 %v166, %v165
    %v178 = vpack.c.b16 %v168, %v167
    %v179 = vpack.c.b16 %v170, %v169
    %v180 = vpack.c.b16 %v172, %v171
    %189 = vmatpush.bf16.msra.mxu0 %v180
    %190 = vmatpush.bf16.msra.mxu0 %v179
    %191 = vmatpush.bf16.msra.mxu0 %v178
    %192 = vmatpush.bf16.msra.mxu0 %v177
    %193 = vmatpush.bf16.msra.mxu0 %v176
    %194 = vmatpush.bf16.msra.mxu0 %v175
    %195 = vmatpush.bf16.msra.mxu0 %v174
    %196 = vmatpush.bf16.msra.mxu0 %v173
    %197 = vmatmul.bf16.gmra.mxu0 %v120
    %v198 = vpop.f32.mrf.mxu0
    %v199 = vadd.f32 %v139, %v198
    %v200 = vpop.f32.mrf.mxu0
    %201 = vdwg.mxu0
    %v202 = vmax.f32 %v199, 0.0
    %v203 = vpack.c.bf16 %v202, %v202
    %v204 = vld [vmem:[#allocation8] sm:$0xf]
    %v205 = vld [vmem:[#allocation8 + $0x4] sm:$0xf]
    %v206 = vld [vmem:[#allocation8 + $0x8] sm:$0xf]
    %v207 = vld [vmem:[#allocation8 + $0xc] sm:$0xf]
    %v208 = vld [vmem:[#allocation8 + $0x10] sm:$0xf]
    %v209 = vld [vmem:[#allocation8 + $0x14] sm:$0xf]
    %v210 = vld [vmem:[#allocation8 + $0x18] sm:$0xf]
    %v211 = vld [vmem:[#allocation8 + $0x1c] sm:$0xf]
    %v212 = vld [vmem:[#allocation8 + $0x20] sm:$0xf]
    %v213 = vld [vmem:[#allocation8 + $0x24] sm:$0xf]
    %v214 = vld [vmem:[#allocation8 + $0x28] sm:$0xf]
    %v215 = vld [vmem:[#allocation8 + $0x2c] sm:$0xf]
    %v216 = vld [vmem:[#allocation8 + $0x30] sm:$0xf]
    %v217 = vld [vmem:[#allocation8 + $0x34] sm:$0xf]
    %v218 = vld [vmem:[#allocation8 + $0x38] sm:$0xf]
    %v219 = vld [vmem:[#allocation8 + $0x3c] sm:$0xf]
    %v220 = vld [vmem:[%s6] sm:$0x1]
    %v222 = vperm.slane %v220, 0
    %v240 = vunpack.c.l.b16 %v204
    %v241 = vunpack.c.l.b16 %v205
    %v242 = vunpack.c.l.b16 %v206
    %v243 = vunpack.c.l.b16 %v207
    %v244 = vunpack.c.l.b16 %v208
    %v245 = vunpack.c.l.b16 %v209
    %v246 = vunpack.c.l.b16 %v210
    %v247 = vunpack.c.l.b16 %v211
    %v248 = vunpack.c.l.b16 %v212
    %v249 = vunpack.c.l.b16 %v213
    %v250 = vunpack.c.l.b16 %v214
    %v251 = vunpack.c.l.b16 %v215
    %v252 = vunpack.c.l.b16 %v216
    %v253 = vunpack.c.l.b16 %v217
    %v254 = vunpack.c.l.b16 %v218
    %v255 = vunpack.c.l.b16 %v219
    %v256 = vpack.c.b16 %v241, %v240
    %v257 = vpack.c.b16 %v243, %v242
    %v258 = vpack.c.b16 %v245, %v244
    %v259 = vpack.c.b16 %v247, %v246
    %v260 = vpack.c.b16 %v249, %v248
    %v261 = vpack.c.b16 %v251, %v250
    %v262 = vpack.c.b16 %v253, %v252
    %v263 = vpack.c.b16 %v255, %v254
    %272 = vmatpush.bf16.msra.mxu0 %v263
    %273 = vmatpush.bf16.msra.mxu0 %v262
    %274 = vmatpush.bf16.msra.mxu0 %v261
    %275 = vmatpush.bf16.msra.mxu0 %v260
    %276 = vmatpush.bf16.msra.mxu0 %v259
    %277 = vmatpush.bf16.msra.mxu0 %v258
    %278 = vmatpush.bf16.msra.mxu0 %v257
    %279 = vmatpush.bf16.msra.mxu0 %v256
    %280 = vmatmul.bf16.gmra.mxu0 %v203
    %v281 = vpop.f32.mrf.mxu0
    %v282 = vadd.f32 %v222, %v281
    %v283 = vpop.f32.mrf.mxu0
    %284 = vdwg.mxu0
    %285 = vmax.xlane.f32.xlu0 %v282
    %v286 = vpop.xlane.xlu0 %285
    %v287 = vsub.f32 %v282, %v286
    %v288 = vmul.f32 %v287, 1.442695
    %v289 = vpow.pop %v288
    %290 = vadd.xlane.f32.xlu0 %v289
    %v291 = vpop.xlane.xlu0 %290
    %v292 = vrcp.pop %v291
    %v293 = vmul.f32 %v289, %v292
    %294 = vst [vmem:[#allocation10] sm:$0xff] %v293
    // Predicated region
    $region46: #{tpu_custom_call.1} parent=1 // pred_check
      _
    $region47: #{tpu_custom_call.1} parent=1 // pred_check_branch
      %296 = sbr.rel (0) target = $region49
    $region48: #{tpu_custom_call.1} parent=1 // pred_region
      %298 = vsyncadd [#allocation4], 0
      %s300 = sshll.u32 [#allocation10], 4
      %s301 = int_to_ptr.vmem [resolvable:$true] %s300
      %s302 = sshll.u32 %s7, 4
      %s303 = int_to_ptr.hbm [resolvable:$true] %s302
      %305 = dma.vmem_to_hbm [thread:$0]  %s301, 128, %s303, [#allocation4]
    $region49: #{tpu_custom_call.1} parent=1 // pred_fallthru
      _
    // Predicated region
    $region50: #{tpu_custom_call.1} parent=1 // pred_check
      _
    $region51: #{tpu_custom_call.1} parent=1 // pred_check_branch
      %307 = sbr.rel (0) target = $region53
    $region52: #{tpu_custom_call.1} parent=1 // pred_region
      %309 = dma.done [#allocation4], 128
    $region53: #{tpu_custom_call.1} parent=1 // pred_fallthru
      _
    %310 = vsyncpa [#allocation3], 1
    %311 = vsyncpa [#allocation6], 1
    %312 = vsyncpa [#allocation9], 1
    %313 = vsyncpa [#allocation4], 1

// kernel: tpu_custom_call.1
$region0: #{tpu_custom_call.1}
  #allocation0 [shape = 'u32[]', space=smem, size = 0x4, offset = 0x4, fixed_abs, tag = 'smem constant byte address 0x4 - core index']
  #allocation1 [shape = 'u32[72,128]{1,0:T(1,128)}', space=vmem, size = 0x9000, scoped, tag = 'internal scratch']
  %s0 = inlined_call_operand.hbm [shape: bf16[8,16], index: 0, kind: input, shape index: {}]
  %s1 = inlined_call_operand.hbm [shape: bf16[16,128], index: 1, kind: input, shape index: {}]
  %s2 = inlined_call_operand.vmem [shape: f32[1,128], index: 2, kind: input, shape index: {}]
  %s3 = inlined_call_operand.hbm [shape: bf16[128,128], index: 3, kind: input, shape index: {}]
  %s4 = inlined_call_operand.vmem [shape: f32[1,128], index: 4, kind: input, shape index: {}]
  %s5 = inlined_call_operand.hbm [shape: bf16[128,128], index: 5, kind: input, shape index: {}]
  %s6 = inlined_call_operand.vmem [shape: f32[1,128], index: 6, kind: input, shape index: {}]
  %s7 = inlined_call_operand.hbm [shape: f32[8,128], index: 7, kind: output, shape index: {}]
  %s8 = sld [smem:[#allocation0]]
  $region54: #{tpu_custom_call.1} parent=0
    _
  %s10 = ssub.s32 1, %s8
  %s11 = scalar_select 0, %s10, %s8
  $region1: #{tpu_custom_call.1} parent=0
    #allocation2 [shape = 'u8[2048]{0}', space=vmem, size = 0x800, scoped, tag = 'input window, operand 0, single buffered']
    #allocation3 [shape = 's32[1]{0}', space=sflag, size = 0x4, scoped, tag = 'scoped memory for tpu_custom_call.1']
    #allocation4 [shape = 's32[1]{0}', space=sflag, size = 0x4, scoped, tag = 'scoped memory for tpu_custom_call.1']
    #allocation5 [shape = 'u8[4096]{0}', space=vmem, size = 0x1000, scoped, tag = 'input window, operand 1, single buffered']
    #allocation6 [shape = 's32[1]{0}', space=sflag, size = 0x4, scoped, tag = 'scoped memory for tpu_custom_call.1']
    #allocation7 [shape = 'u8[32768]{0}', space=vmem, size = 0x8000, scoped, tag = 'input window, operand 3, single buffered']
    #allocation8 [shape = 'u8[32768]{0}', space=vmem, size = 0x8000, scoped, tag = 'input window, operand 5, single buffered']
    #allocation9 [shape = 's32[1]{0}', space=sflag, size = 0x4, scoped, tag = 'scoped memory for tpu_custom_call.1']
    #allocation10 [shape = 'u8[4096]{0}', space=vmem, size = 0x1000, scoped, tag = 'output window, operand 0, single buffered']
    %12 = vsyncpa [#allocation3], 0
    %13 = vsyncpa [#allocation6], 0
    %14 = vsyncpa [#allocation9], 0
    %15 = vsyncpa [#allocation4], 0
    // Predicated region
    $region2: #{tpu_custom_call.1} parent=1 // pred_check
      _
    $region3: #{tpu_custom_call.1} parent=1 // pred_check_branch
      %17 = sbr.rel (0) target = $region5
    $region4: #{tpu_custom_call.1} parent=1 // pred_region
      %19 = vsyncadd [#allocation3], 0
      %s21 = sshll.u32 %s0, 4
      %s22 = int_to_ptr.hbm [resolvable:$true] %s21
      %s23 = sshll.u32 [#allocation2], 4
      %s24 = int_to_ptr.vmem [resolvable:$true] %s23
      %26 = dma.hbm_to_vmem [thread:$0]  %s22, 64, %s24, [#allocation3]
    $region5: #{tpu_custom_call.1} parent=1 // pred_fallthru
      _
    // Predicated region
    $region6: #{tpu_custom_call.1} parent=1 // pred_check
      _
    $region7: #{tpu_custom_call.1} parent=1 // pred_check_branch
      %28 = sbr.rel (0) target = $region9
    $region8: #{tpu_custom_call.1} parent=1 // pred_region
      %30 = vsyncadd [#allocation6], 0
      %s31 = sshll.u32 %s1, 4
      %s32 = int_to_ptr.hbm [resolvable:$true] %s31
      %s33 = sshll.u32 [#allocation5], 4
      %s34 = int_to_ptr.vmem [resolvable:$true] %s33
      %39 = dma.hbm_to_vmem [thread:$0]  %s32, 128, %s34, [#allocation6], 64, 64, 4
    $region9: #{tpu_custom_call.1} parent=1 // pred_fallthru
      _
    // Predicated region
    $region10: #{tpu_custom_call.1} parent=1 // pred_check
      _
    $region11: #{tpu_custom_call.1} parent=1 // pred_check_branch
      %41 = sbr.rel (0) target = $region13
    $region12: #{tpu_custom_call.1} parent=1 // pred_region
      _
    $region13: #{tpu_custom_call.1} parent=1 // pred_fallthru
      _
    // Predicated region
    $region14: #{tpu_custom_call.1} parent=1 // pred_check
      _
    $region15: #{tpu_custom_call.1} parent=1 // pred_check_branch
      %43 = sbr.rel (0) target = $region17
    $region16: #{tpu_custom_call.1} parent=1 // pred_region
      %45 = vsyncadd [#allocation6], 0
      %s46 = sshll.u32 %s3, 4
      %s47 = int_to_ptr.hbm [resolvable:$true] %s46
      %s48 = sshll.u32 [#allocation7], 4
      %s49 = int_to_ptr.vmem [resolvable:$true] %s48
      %54 = dma.hbm_to_vmem [thread:$0]  %s47, 1024, %s49, [#allocation6], 64, 64, 4
    $region17: #{tpu_custom_call.1} parent=1 // pred_fallthru
      _
    // Predicated region
    $region18: #{tpu_custom_call.1} parent=1 // pred_check
      _
    $region19: #{tpu_custom_call.1} parent=1 // pred_check_branch
      %56 = sbr.rel (0) target = $region21
    $region20: #{tpu_custom_call.1} parent=1 // pred_region
      _
    $region21: #{tpu_custom_call.1} parent=1 // pred_fallthru
      _
    // Predicated region
    $region22: #{tpu_custom_call.1} parent=1 // pred_check
      _
    $region23: #{tpu_custom_call.1} parent=1 // pred_check_branch
      %58 = sbr.rel (0) target = $region25
    $region24: #{tpu_custom_call.1} parent=1 // pred_region
      %60 = vsyncadd [#allocation9], 0
      %s61 = sshll.u32 %s5, 4
      %s62 = int_to_ptr.hbm [resolvable:$true] %s61
      %s63 = sshll.u32 [#allocation8], 4
      %s64 = int_to_ptr.vmem [resolvable:$true] %s63
      %69 = dma.hbm_to_vmem [thread:$0]  %s62, 1024, %s64, [#allocation9], 64, 64, 4
    $region25: #{tpu_custom_call.1} parent=1 // pred_fallthru
      _
    // Predicated region
    $region26: #{tpu_custom_call.1} parent=1 // pred_check
      _
    $region27: #{tpu_custom_call.1} parent=1 // pred_check_branch
      %71 = sbr.rel (0) target = $region29
    $region28: #{tpu_custom_call.1} parent=1 // pred_region
      _
    $region29: #{tpu_custom_call.1} parent=1 // pred_fallthru
      _
    // Predicated region
    $region30: #{tpu_custom_call.1} parent=1 // pred_check
      _
    $region31: #{tpu_custom_call.1} parent=1 // pred_check_branch
      %73 = sbr.rel (0) target = $region33
    $region32: #{tpu_custom_call.1} parent=1 // pred_region
      %75 = dma.done [#allocation3], 64
    $region33: #{tpu_custom_call.1} parent=1 // pred_fallthru
      _
    // Predicated region
    $region34: #{tpu_custom_call.1} parent=1 // pred_check
      _
    $region35: #{tpu_custom_call.1} parent=1 // pred_check_branch
      %77 = sbr.rel (0) target = $region37
    $region36: #{tpu_custom_call.1} parent=1 // pred_region
      %79 = dma.done [#allocation6], 128
    $region37: #{tpu_custom_call.1} parent=1 // pred_fallthru
      _
    // Predicated region
    $region38: #{tpu_custom_call.1} parent=1 // pred_check
      _
    $region39: #{tpu_custom_call.1} parent=1 // pred_check_branch
      %81 = sbr.rel (0) target = $region41
    $region40: #{tpu_custom_call.1} parent=1 // pred_region
      %83 = dma.done [#allocation6], 1024
    $region41: #{tpu_custom_call.1} parent=1 // pred_fallthru
      _
    // Predicated region
    $region42: #{tpu_custom_call.1} parent=1 // pred_check
      _
    $region43: #{tpu_custom_call.1} parent=1 // pred_check_branch
      %85 = sbr.rel (0) target = $region45
    $region44: #{tpu_custom_call.1} parent=1 // pred_region
      %87 = dma.done [#allocation9], 1024
    $region45: #{tpu_custom_call.1} parent=1 // pred_fallthru
      _
    %v89 = vld [vmem:[#allocation2] sm:$0xf]
    %v90 = vld [vmem:[#allocation5] sm:$0xf]
    %v91 = vld [vmem:[#allocation5 + $0x4] sm:$0xf]
    %v92 = vld [vmem:[%s2] sm:$0x1]
    %v94 = vperm.slane %v92, 0
    %v98 = vunpack.c.l.b16 %v90
    %v99 = vunpack.c.l.b16 %v91
    %v100 = vpack.c.b16 %v99, %v98
    %vm102 = vcmask 130048
    %v104 = vsel %vm102, %v89, 0
    %106 = vmatpush.bf16.msra.mxu0 0
    %107 = vmatpush.bf16.msra.mxu0 0
    %108 = vmatpush.bf16.msra.mxu0 0
    %109 = vmatpush.bf16.msra.mxu0 0
    %110 = vmatpush.bf16.msra.mxu0 0
    %111 = vmatpush.bf16.msra.mxu0 0
    %112 = vmatpush.bf16.msra.mxu0 0
    %113 = vmatpush.bf16.msra.mxu0 %v100
    %114 = vmatmul.bf16.gmra.mxu0 %v104
    %v115 = vpop.f32.mrf.mxu0
    %v116 = vadd.f32 %v94, %v115
    %v117 = vpop.f32.mrf.mxu0
    %118 = vdwg.mxu0
    %v119 = vmax.f32 %v116, 0.0
    %v120 = vpack.c.bf16 %v119, %v119
    %v121 = vld [vmem:[#allocation7] sm:$0xf]
    %v122 = vld [vmem:[#allocation7 + $0x4] sm:$0xf]
    %v123 = vld [vmem:[#allocation7 + $0x8] sm:$0xf]
    %v124 = vld [vmem:[#allocation7 + $0xc] sm:$0xf]
    %v125 = vld [vmem:[#allocation7 + $0x10] sm:$0xf]
    %v126 = vld [vmem:[#allocation7 + $0x14] sm:$0xf]
    %v127 = vld [vmem:[#allocation7 + $0x18] sm:$0xf]
    %v128 = vld [vmem:[#allocation7 + $0x1c] sm:$0xf]
    %v129 = vld [vmem:[#allocation7 + $0x20] sm:$0xf]
    %v130 = vld [vmem:[#allocation7 + $0x24] sm:$0xf]
    %v131 = vld [vmem:[#allocation7 + $0x28] sm:$0xf]
    %v132 = vld [vmem:[#allocation7 + $0x2c] sm:$0xf]
    %v133 = vld [vmem:[#allocation7 + $0x30] sm:$0xf]
    %v134 = vld [vmem:[#allocation7 + $0x34] sm:$0xf]
    %v135 = vld [vmem:[#allocation7 + $0x38] sm:$0xf]
    %v136 = vld [vmem:[#allocation7 + $0x3c] sm:$0xf]
    %v137 = vld [vmem:[%s4] sm:$0x1]
    %v139 = vperm.slane %v137, 0
    %v157 = vunpack.c.l.b16 %v121
    %v158 = vunpack.c.l.b16 %v122
    %v159 = vunpack.c.l.b16 %v123
    %v160 = vunpack.c.l.b16 %v124
    %v161 = vunpack.c.l.b16 %v125
    %v162 = vunpack.c.l.b16 %v126
    %v163 = vunpack.c.l.b16 %v127
    %v164 = vunpack.c.l.b16 %v128
    %v165 = vunpack.c.l.b16 %v129
    %v166 = vunpack.c.l.b16 %v130
    %v167 = vunpack.c.l.b16 %v131
    %v168 = vunpack.c.l.b16 %v132
    %v169 = vunpack.c.l.b16 %v133
    %v170 = vunpack.c.l.b16 %v134
    %v171 = vunpack.c.l.b16 %v135
    %v172 = vunpack.c.l.b16 %v136
    %v173 = vpack.c.b16 %v158, %v157
    %v174 = vpack.c.b16 %v160, %v159
    %v175 = vpack.c.b16 %v162, %v161
    %v176 = vpack.c.b16 %v164, %v163
    %v177 = vpack.c.b16 %v166, %v165
    %v178 = vpack.c.b16 %v168, %v167
    %v179 = vpack.c.b16 %v170, %v169
    %v180 = vpack.c.b16 %v172, %v171
    %189 = vmatpush.bf16.msra.mxu0 %v180
    %190 = vmatpush.bf16.msra.mxu0 %v179
    %191 = vmatpush.bf16.msra.mxu0 %v178
    %192 = vmatpush.bf16.msra.mxu0 %v177
    %193 = vmatpush.bf16.msra.mxu0 %v176
    %194 = vmatpush.bf16.msra.mxu0 %v175
    %195 = vmatpush.bf16.msra.mxu0 %v174
    %196 = vmatpush.bf16.msra.mxu0 %v173
    %197 = vmatmul.bf16.gmra.mxu0 %v120
    %v198 = vpop.f32.mrf.mxu0
    %v199 = vadd.f32 %v139, %v198
    %v200 = vpop.f32.mrf.mxu0
    %201 = vdwg.mxu0
    %v202 = vmax.f32 %v199, 0.0
    %v203 = vpack.c.bf16 %v202, %v202
    %v204 = vld [vmem:[#allocation8] sm:$0xf]
    %v205 = vld [vmem:[#allocation8 + $0x4] sm:$0xf]
    %v206 = vld [vmem:[#allocation8 + $0x8] sm:$0xf]
    %v207 = vld [vmem:[#allocation8 + $0xc] sm:$0xf]
    %v208 = vld [vmem:[#allocation8 + $0x10] sm:$0xf]
    %v209 = vld [vmem:[#allocation8 + $0x14] sm:$0xf]
    %v210 = vld [vmem:[#allocation8 + $0x18] sm:$0xf]
    %v211 = vld [vmem:[#allocation8 + $0x1c] sm:$0xf]
    %v212 = vld [vmem:[#allocation8 + $0x20] sm:$0xf]
    %v213 = vld [vmem:[#allocation8 + $0x24] sm:$0xf]
    %v214 = vld [vmem:[#allocation8 + $0x28] sm:$0xf]
    %v215 = vld [vmem:[#allocation8 + $0x2c] sm:$0xf]
    %v216 = vld [vmem:[#allocation8 + $0x30] sm:$0xf]
    %v217 = vld [vmem:[#allocation8 + $0x34] sm:$0xf]
    %v218 = vld [vmem:[#allocation8 + $0x38] sm:$0xf]
    %v219 = vld [vmem:[#allocation8 + $0x3c] sm:$0xf]
    %v220 = vld [vmem:[%s6] sm:$0x1]
    %v222 = vperm.slane %v220, 0
    %v240 = vunpack.c.l.b16 %v204
    %v241 = vunpack.c.l.b16 %v205
    %v242 = vunpack.c.l.b16 %v206
    %v243 = vunpack.c.l.b16 %v207
    %v244 = vunpack.c.l.b16 %v208
    %v245 = vunpack.c.l.b16 %v209
    %v246 = vunpack.c.l.b16 %v210
    %v247 = vunpack.c.l.b16 %v211
    %v248 = vunpack.c.l.b16 %v212
    %v249 = vunpack.c.l.b16 %v213
    %v250 = vunpack.c.l.b16 %v214
    %v251 = vunpack.c.l.b16 %v215
    %v252 = vunpack.c.l.b16 %v216
    %v253 = vunpack.c.l.b16 %v217
    %v254 = vunpack.c.l.b16 %v218
    %v255 = vunpack.c.l.b16 %v219
    %v256 = vpack.c.b16 %v241, %v240
    %v257 = vpack.c.b16 %v243, %v242
    %v258 = vpack.c.b16 %v245, %v244
    %v259 = vpack.c.b16 %v247, %v246
    %v260 = vpack.c.b16 %v249, %v248
    %v261 = vpack.c.b16 %v251, %v250
    %v262 = vpack.c.b16 %v253, %v252
    %v263 = vpack.c.b16 %v255, %v254
    %272 = vmatpush.bf16.msra.mxu0 %v263
    %273 = vmatpush.bf16.msra.mxu0 %v262
    %274 = vmatpush.bf16.msra.mxu0 %v261
    %275 = vmatpush.bf16.msra.mxu0 %v260
    %276 = vmatpush.bf16.msra.mxu0 %v259
    %277 = vmatpush.bf16.msra.mxu0 %v258
    %278 = vmatpush.bf16.msra.mxu0 %v257
    %279 = vmatpush.bf16.msra.mxu0 %v256
    %280 = vmatmul.bf16.gmra.mxu0 %v203
    %v281 = vpop.f32.mrf.mxu0
    %v282 = vadd.f32 %v222, %v281
    %v283 = vpop.f32.mrf.mxu0
    %284 = vdwg.mxu0
    %285 = vmax.xlane.f32.xlu0 %v282
    %v286 = vpop.xlane.xlu0 %285
    %v287 = vsub.f32 %v282, %v286
    %v288 = vmul.f32 %v287, 1.442695
    %v289 = vpow.pop %v288
    %290 = vadd.xlane.f32.xlu0 %v289
    %v291 = vpop.xlane.xlu0 %290
    %v292 = vrcp.pop %v291
    %v293 = vmul.f32 %v289, %v292
    %294 = vst [vmem:[#allocation10] sm:$0xff] %v293
    // Predicated region
    $region46: #{tpu_custom_call.1} parent=1 // pred_check
      _
    $region47: #{tpu_custom_call.1} parent=1 // pred_check_branch
      %296 = sbr.rel (0) target = $region49
    $region48: #{tpu_custom_call.1} parent=1 // pred_region
      %298 = vsyncadd [#allocation4], 0
      %s300 = sshll.u32 [#allocation10], 4
      %s301 = int_to_ptr.vmem [resolvable:$true] %s300
      %s302 = sshll.u32 %s7, 4
      %s303 = int_to_ptr.hbm [resolvable:$true] %s302
      %305 = dma.vmem_to_hbm [thread:$0]  %s301, 128, %s303, [#allocation4]
    $region49: #{tpu_custom_call.1} parent=1 // pred_fallthru
      _
    // Predicated region
    $region50: #{tpu_custom_call.1} parent=1 // pred_check
      _
    $region51: #{tpu_custom_call.1} parent=1 // pred_check_branch
      %307 = sbr.rel (0) target = $region53
    $region52: #{tpu_custom_call.1} parent=1 // pred_region
      %309 = dma.done [#allocation4], 128
    $region53: #{tpu_custom_call.1} parent=1 // pred_fallthru
      _
    %310 = vsyncpa [#allocation3], 1
    %311 = vsyncpa [#allocation6], 1
    %312 = vsyncpa [#allocation9], 1
    %313 = vsyncpa [#allocation4], 1

</llo_original>
